<compile_context>
chip_gen: v7x
topology: tpu7x:2x2x1
jax: 0.10.0
libtpu: 0.0.40
codegen_flags: <defaults>
</compile_context>

<pallas_src>
import functools

import jax
import jax.numpy as jnp
from jax.experimental import pallas as pl
from jax.experimental.pallas import tpu as pltpu


def _round_up(x, m):
    return (x + m - 1) // m * m


def _pick_tile(p, max_tile, min_tiles):
    """Largest multiple of 128 dividing `p`, <= max_tile, preferring >= min_tiles grid steps.

    Returns 0 if no 128-multiple divides p (caller falls back to padding)."""
    candidates = [t for t in range(128, min(p, max_tile) + 1, 128) if p % t == 0]
    if not candidates:
        return 0
    for t in sorted(candidates, reverse=True):
        if p // t >= min_tiles:
            return t
    return candidates[0]  # smallest divisor; best effort on min_tiles


def _mlp_kernel(x_ref, w0_ref, b0_ref, w1_ref, b1_ref, w2_ref, b2_ref, o_ref):
    """One (C_in, tile_pixels) block: conv1x1 -> relu -> conv1x1 -> relu -> conv1x1 -> sigmoid.

    Matmuls feed the MXU bf16 operands; accumulation, bias-add, ReLU and sigmoid are f32."""
    x = x_ref[...].astype(jnp.bfloat16)  # (c_in, tile), pixels on lanes

    # initial conv + relu   (W0 @ X + b0)
    h = jnp.dot(w0_ref[...], x, preferred_element_type=jnp.float32) + b0_ref[...]
    h = jnp.maximum(h, 0.0).astype(jnp.bfloat16)

    # hidden conv + relu    (W1 @ H + b1)
    h = jnp.dot(w1_ref[...], h, preferred_element_type=jnp.float32) + b1_ref[...]
    h = jnp.maximum(h, 0.0).astype(jnp.bfloat16)

    # final conv + sigmoid  (W2 @ H + b2)
    y = jnp.dot(w2_ref[...], h, preferred_element_type=jnp.float32) + b2_ref[...]
    o_ref[...] = jax.nn.sigmoid(y).astype(o_ref.dtype)


@functools.partial(jax.jit, static_argnames=("tile_pixels",))
def feature_extractor_forward(volume, params, tile_pixels=512):
    """volume: NCHW float32.  params: torch-layout (C_out, C_in) weights and (C_out, 1) biases."""
    n, c_in, h, w = volume.shape
    c_out = params["w2"].shape[0]
    p = h * w

    # (N, C, H, W) -> (N, C, P): free reshape; channels on sublanes, pixels on lanes.
    x = volume.reshape(n, c_in, p)

    # Pixel tile: multiple of 128 lanes, ideally dividing P exactly (no pad / slice),
    # and giving >= 2 grid steps when N == 1 so both v7x TensorCores are fed.
    min_tiles = 1 if n >= 2 else 2
    tile = _pick_tile(p, tile_pixels, min_tiles)
    if tile == 0:
        # Fallback: ragged P with no 128-multiple divisor -> pad (extra HBM copy).
        tile = min(_round_up(tile_pixels, 128), _round_up(p, 128))
        p_pad = _round_up(p, tile)
        x = jnp.pad(x, ((0, 0), (0, 0), (0, p_pad - p)))
    else:
        p_pad = p

    grid = (n, p_pad // tile)

    # bf16 weights for the MXU (tiny, resident across all grid steps); biases stay f32.
    w0 = params["w0"].astype(jnp.bfloat16)
    w1 = params["w1"].astype(jnp.bfloat16)
    w2 = params["w2"].astype(jnp.bfloat16)
    b0, b1, b2 = params["b0"], params["b1"], params["b2"]

    def full_block(arr):
        # Untiled resident operand (weights/biases): constant block index -> no repeated DMA.
        nd = arr.ndim
        return pl.BlockSpec(arr.shape, lambda *_: (0,) * nd)

    out = pl.pallas_call(
        _mlp_kernel,
        out_shape=jax.ShapeDtypeStruct((n, c_out, p_pad), jnp.float32),
        grid_spec=pltpu.PrefetchScalarGridSpec(
            num_scalar_prefetch=0,
            grid=grid,
            in_specs=[
                # batch dim squeezed out of the kernel ref; channels x pixel-tile block.
                pl.BlockSpec((None, c_in, tile), lambda b, t: (b, 0, t)),
                full_block(w0),
                full_block(b0),
                full_block(w1),
                full_block(b1),
                full_block(w2),
                full_block(b2),
            ],
            out_specs=pl.BlockSpec((None, c_out, tile), lambda b, t: (b, 0, t)),
        ),
        compiler_params=pltpu.CompilerParams(
            dimension_semantics=("parallel", "parallel"),
        ),
    )(x, w0, b0, w1, b1, w2, b2)

    if p_pad != p:
        out = out[:, :, :p]
    return out.reshape(n, c_out, h, w)


def init_params(key, n_input_channels, n_hidden_features, n_output_channels):
    """Deterministic synthetic init.  Weights in torch conv layout (C_out, C_in)
    (kernel_size=1 squeezed) so the kernel computes W @ X + b; biases are (C_out, 1)."""
    dims = [n_input_channels] + list(n_hidden_features) + [n_output_channels]
    assert len(dims) == 4, "this script hard-codes one hidden layer (3 convs total)"
    params = {}
    for idx in range(3):
        c_in, c_out = dims[idx], dims[idx + 1]
        key, kw, kb = jax.random.split(key, 3)
        bound = 1.0 / jnp.sqrt(jnp.float32(c_in))  # matches torch conv default fan-in bound
        params[f"w{idx}"] = jax.random.uniform(
            kw, (c_out, c_in), jnp.float32, -bound, bound)
        params[f"b{idx}"] = jax.random.uniform(
            kb, (c_out, 1), jnp.float32, -bound, bound)
    return params


def reference_forward(volume, params):
    """Pure-JAX f32 reference matching the PyTorch forward semantics (NCHW, 1x1 convs)."""
    n, c, h, w = volume.shape
    x = volume.reshape(n, c, h * w)  # (n, c, p)

    def conv(x, wk, bk):
        return jnp.einsum("oc,ncp->nop", params[wk], x) + params[bk][None, :, :]

    x = jnp.maximum(conv(x, "w0", "b0"), 0.0)
    x = jnp.maximum(conv(x, "w1", "b1"), 0.0)
    x = jax.nn.sigmoid(conv(x, "w2", "b2"))
    return x.reshape(n, -1, h, w)


if __name__ == "__main__":
    # Module config: n_dims=2, n_input_channels=4, n_hidden_features=[32, 32], n_output_channels=8
    N, C_IN, H, W = 2, 4, 16, 16
    HIDDEN = [32, 32]
    C_OUT = 8

    key = jax.random.PRNGKey(0)
    key, kx = jax.random.split(key)
    volume = jax.random.normal(kx, (N, C_IN, H, W), jnp.float32)

    params = init_params(key, C_IN, HIDDEN, C_OUT)

    out = feature_extractor_forward(volume, params)
    out = jax.block_until_ready(out)

    ref = reference_forward(volume, params)
    assert out.shape == (N, C_OUT, H, W)
    # bf16 MXU operands vs the f32 reference: sigmoid outputs, loose absolute tolerance.
    assert jnp.allclose(out, ref, atol=2e-2, rtol=0.0), float(jnp.max(jnp.abs(out - ref)))

    print("KERNEL_OK")
</pallas_src>

<mosaic_0001>
module attributes {stable_mosaic.version = 11 : i64} {
  func.func @_mlp_kernel(%arg0: i32, %arg1: i32, %arg2: memref<1x4x256xf32, #tpu.memory_space<vmem>>, %arg3: memref<32x4xbf16, #tpu.memory_space<vmem>>, %arg4: memref<32x1xf32, #tpu.memory_space<vmem>>, %arg5: memref<32x32xbf16, #tpu.memory_space<vmem>>, %arg6: memref<32x1xf32, #tpu.memory_space<vmem>>, %arg7: memref<8x32xbf16, #tpu.memory_space<vmem>>, %arg8: memref<8x1xf32, #tpu.memory_space<vmem>>, %arg9: memref<1x8x256xf32, #tpu.memory_space<vmem>>) attributes {dimension_semantics = [#tpu.dimension_semantics<parallel>, #tpu.dimension_semantics<parallel>], iteration_bounds = array<i64: 2, 1>, scalar_prefetch = 0 : i64, scratch_operands = 0 : i64, tpu.core_type = #tpu.core_type<tc>, window_params = [{transform_indices = @transform_0, window_bounds = array<i64: 1, 4, 256>}, {pipeline_mode = #tpu.pipeline_mode<synchronous>, transform_indices = @transform_1, window_bounds = array<i64: 32, 4>}, {pipeline_mode = #tpu.pipeline_mode<synchronous>, transform_indices = @transform_2, window_bounds = array<i64: 32, 1>}, {pipeline_mode = #tpu.pipeline_mode<synchronous>, transform_indices = @transform_3, window_bounds = array<i64: 32, 32>}, {pipeline_mode = #tpu.pipeline_mode<synchronous>, transform_indices = @transform_4, window_bounds = array<i64: 32, 1>}, {pipeline_mode = #tpu.pipeline_mode<synchronous>, transform_indices = @transform_5, window_bounds = array<i64: 8, 32>}, {pipeline_mode = #tpu.pipeline_mode<synchronous>, transform_indices = @transform_6, window_bounds = array<i64: 8, 1>}, {transform_indices = @transform_7, window_bounds = array<i64: 1, 8, 256>}]} {
    %c0 = arith.constant 0 : index
    %c0_0 = arith.constant 0 : index
    %c0_1 = arith.constant 0 : index
    %0 = vector.load %arg2[%c0, %c0_0, %c0_1] : memref<1x4x256xf32, #tpu.memory_space<vmem>>, vector<1x4x256xf32>
    %1 = vector.shape_cast %0 : vector<1x4x256xf32> to vector<4x256xf32>
    %2 = arith.truncf %1 : vector<4x256xf32> to vector<4x256xbf16>
    %c0_2 = arith.constant 0 : index
    %c0_3 = arith.constant 0 : index
    %3 = vector.load %arg3[%c0_2, %c0_3] : memref<32x4xbf16, #tpu.memory_space<vmem>>, vector<32x4xbf16>
    %cst = arith.constant dense<0.000000e+00> : vector<32x256xf32>
    %4 = tpu.matmul %3, %2, %cst {dimension_numbers = #tpu.dot_dimension_numbers<[1], [0], [0], [1], [0, 0, 1, 1], [], []>} : vector<32x4xbf16>, vector<4x256xbf16>, vector<32x256xf32> -> vector<32x256xf32>
    %c0_4 = arith.constant 0 : index
    %c0_5 = arith.constant 0 : index
    %5 = vector.load %arg4[%c0_4, %c0_5] : memref<32x1xf32, #tpu.memory_space<vmem>>, vector<32x1xf32>
    %6 = vector.broadcast %5 : vector<32x1xf32> to vector<32x256xf32>
    %7 = arith.addf %4, %6 : vector<32x256xf32>
    %cst_6 = arith.constant 0.000000e+00 : f32
    %8 = vector.broadcast %cst_6 : f32 to vector<32x256xf32>
    %9 = arith.maximumf %7, %8 : vector<32x256xf32>
    %10 = arith.truncf %9 : vector<32x256xf32> to vector<32x256xbf16>
    %c0_7 = arith.constant 0 : index
    %c0_8 = arith.constant 0 : index
    %11 = vector.load %arg5[%c0_7, %c0_8] : memref<32x32xbf16, #tpu.memory_space<vmem>>, vector<32x32xbf16>
    %cst_9 = arith.constant dense<0.000000e+00> : vector<32x256xf32>
    %12 = tpu.matmul %11, %10, %cst_9 {dimension_numbers = #tpu.dot_dimension_numbers<[1], [0], [0], [1], [0, 0, 1, 1], [], []>} : vector<32x32xbf16>, vector<32x256xbf16>, vector<32x256xf32> -> vector<32x256xf32>
    %c0_10 = arith.constant 0 : index
    %c0_11 = arith.constant 0 : index
    %13 = vector.load %arg6[%c0_10, %c0_11] : memref<32x1xf32, #tpu.memory_space<vmem>>, vector<32x1xf32>
    %14 = vector.broadcast %13 : vector<32x1xf32> to vector<32x256xf32>
    %15 = arith.addf %12, %14 : vector<32x256xf32>
    %cst_12 = arith.constant 0.000000e+00 : f32
    %16 = vector.broadcast %cst_12 : f32 to vector<32x256xf32>
    %17 = arith.maximumf %15, %16 : vector<32x256xf32>
    %18 = arith.truncf %17 : vector<32x256xf32> to vector<32x256xbf16>
    %c0_13 = arith.constant 0 : index
    %c0_14 = arith.constant 0 : index
    %19 = vector.load %arg7[%c0_13, %c0_14] : memref<8x32xbf16, #tpu.memory_space<vmem>>, vector<8x32xbf16>
    %cst_15 = arith.constant dense<0.000000e+00> : vector<8x256xf32>
    %20 = tpu.matmul %19, %18, %cst_15 {dimension_numbers = #tpu.dot_dimension_numbers<[1], [0], [0], [1], [0, 0, 1, 1], [], []>} : vector<8x32xbf16>, vector<32x256xbf16>, vector<8x256xf32> -> vector<8x256xf32>
    %c0_16 = arith.constant 0 : index
    %c0_17 = arith.constant 0 : index
    %21 = vector.load %arg8[%c0_16, %c0_17] : memref<8x1xf32, #tpu.memory_space<vmem>>, vector<8x1xf32>
    %22 = vector.broadcast %21 : vector<8x1xf32> to vector<8x256xf32>
    %23 = arith.addf %20, %22 : vector<8x256xf32>
    %24 = arith.negf %23 : vector<8x256xf32>
    %25 = math.exp %24 : vector<8x256xf32>
    %cst_18 = arith.constant 1.000000e+00 : f32
    %26 = vector.broadcast %cst_18 : f32 to vector<8x256xf32>
    %27 = arith.addf %26, %25 : vector<8x256xf32>
    %28 = arith.divf %26, %27 : vector<8x256xf32>
    %c0_19 = arith.constant 0 : index
    %c0_20 = arith.constant 0 : index
    %c0_21 = arith.constant 0 : index
    %29 = vector.load %arg9[%c0_19, %c0_20, %c0_21] : memref<1x8x256xf32, #tpu.memory_space<vmem>>, vector<1x8x256xf32>
    %30 = vector.shape_cast %29 : vector<1x8x256xf32> to vector<8x256xf32>
    %31 = vector.shape_cast %28 : vector<8x256xf32> to vector<1x8x256xf32>
    tpu.vector_store %arg9[%c0_19, %c0_20, %c0_21], %31 {strides = array<i32>} : memref<1x8x256xf32, #tpu.memory_space<vmem>>, vector<1x8x256xf32>,
    return
  }
  func.func @transform_0(%arg0: i32, %arg1: i32) -> (i32, i32, i32) {
    %c0_i32 = arith.constant 0 : i32
    %c0_i32_0 = arith.constant 0 : i32
    return %arg0, %c0_i32, %arg1 : i32, i32, i32
  }
  func.func @transform_1(%arg0: i32, %arg1: i32) -> (i32, i32) {
    %c0_i32 = arith.constant 0 : i32
    %c0_i32_0 = arith.constant 0 : i32
    %c0_i32_1 = arith.constant 0 : i32
    return %c0_i32, %c0_i32_0 : i32, i32
  }
  func.func @transform_2(%arg0: i32, %arg1: i32) -> (i32, i32) {
    %c0_i32 = arith.constant 0 : i32
    %c0_i32_0 = arith.constant 0 : i32
    %c0_i32_1 = arith.constant 0 : i32
    return %c0_i32, %c0_i32_0 : i32, i32
  }
  func.func @transform_3(%arg0: i32, %arg1: i32) -> (i32, i32) {
    %c0_i32 = arith.constant 0 : i32
    %c0_i32_0 = arith.constant 0 : i32
    %c0_i32_1 = arith.constant 0 : i32
    return %c0_i32, %c0_i32_0 : i32, i32
  }
  func.func @transform_4(%arg0: i32, %arg1: i32) -> (i32, i32) {
    %c0_i32 = arith.constant 0 : i32
    %c0_i32_0 = arith.constant 0 : i32
    %c0_i32_1 = arith.constant 0 : i32
    return %c0_i32, %c0_i32_0 : i32, i32
  }
  func.func @transform_5(%arg0: i32, %arg1: i32) -> (i32, i32) {
    %c0_i32 = arith.constant 0 : i32
    %c0_i32_0 = arith.constant 0 : i32
    %c0_i32_1 = arith.constant 0 : i32
    return %c0_i32, %c0_i32_0 : i32, i32
  }
  func.func @transform_6(%arg0: i32, %arg1: i32) -> (i32, i32) {
    %c0_i32 = arith.constant 0 : i32
    %c0_i32_0 = arith.constant 0 : i32
    %c0_i32_1 = arith.constant 0 : i32
    return %c0_i32, %c0_i32_0 : i32, i32
  }
  func.func @transform_7(%arg0: i32, %arg1: i32) -> (i32, i32, i32) {
    %c0_i32 = arith.constant 0 : i32
    %c0_i32_0 = arith.constant 0 : i32
    return %arg0, %c0_i32, %arg1 : i32, i32, i32
  }
}

</mosaic_0001>

<llo_original>
// kernel: feature_extractor_forward.1
$region0: #{feature_extractor_forward.1}
  #allocation0 [shape = 'u32[]', space=smem, size = 0x4, offset = 0x4, fixed_abs, tag = 'smem constant byte address 0x4 - core index']
  #allocation1 [shape = 'u32[144,128]{1,0:T(1,128)}', space=vmem, size = 0x12000, scoped, tag = 'internal scratch']
  %s0 = inlined_call_operand.vmem [shape: f32[2,4,256], index: 0, kind: input, shape index: {}]
  %s1 = inlined_call_operand.vmem [shape: bf16[32,4], index: 1, kind: input, shape index: {}]
  %s2 = inlined_call_operand.vmem [shape: f32[32,1], index: 2, kind: input, shape index: {}]
  %s3 = inlined_call_operand.vmem [shape: bf16[32,32], index: 3, kind: input, shape index: {}]
  %s4 = inlined_call_operand.vmem [shape: f32[32,1], index: 4, kind: input, shape index: {}]
  %s5 = inlined_call_operand.vmem [shape: bf16[8,32], index: 5, kind: input, shape index: {}]
  %s6 = inlined_call_operand.vmem [shape: f32[8,1], index: 6, kind: input, shape index: {}]
  %s7 = inlined_call_operand.vmem [shape: f32[2,8,256], index: 7, kind: output, shape index: {}]
  %s8 = sld [smem:[#allocation0]]
  $region61: #{feature_extractor_forward.1} parent=0
    _
  %s10 = ssub.s32 1, %s8
  %s11 = scalar_select 0, %s10, %s8
  loop: start=0, step=1, limit=4
  $region2: #{feature_extractor_forward.1} parent=0 // loop_pre_header
    _
  $region3: #{feature_extractor_forward.1} parent=0 // loop_header
    %s13 = sphi 0, %s17
    %p14 = scmp.ge.s32.totalorder %s13, 4
    %s20 = sphi 0, %s32
    %s21 = sphi 0, %s28
    %s22 = sphi 0, %s20
    %s23 = sphi 0, %s21
    %s24 = sphi 0, %s22
    %s25 = sphi 0, %s23
    %s37 = sphi 0, %s39
    %s40 = sphi 0, %s37
    %s41 = sphi 0, %s40
    %s57 = sphi 0, %s41
    %s61 = sphi 0, %s61
    %s63 = sphi 0, %s61
    %s64 = sphi 0, %s63
    %s78 = sphi 0, %s64
    %s82 = sphi 0, %s82
    %s84 = sphi 0, %s82
    %s85 = sphi 0, %s84
    %s99 = sphi 0, %s85
    %s103 = sphi 0, %s103
    %s105 = sphi 0, %s103
    %s106 = sphi 0, %s105
    %s120 = sphi 0, %s106
    %s124 = sphi 0, %s124
    %s126 = sphi 0, %s124
    %s127 = sphi 0, %s126
    %s141 = sphi 0, %s127
    %s145 = sphi 0, %s145
    %s147 = sphi 0, %s145
    %s148 = sphi 0, %s147
    %s162 = sphi 0, %s148
    %s166 = sphi 0, %s166
    %s168 = sphi 0, %s166
    %s169 = sphi 0, %s168
    %s183 = sphi 0, %s169
    %s191 = sphi 0, %s193
    %s194 = sphi 0, %s191
    %s195 = sphi 0, %s194
    %s211 = sphi 0, %s195
  $region4: #{feature_extractor_forward.1} parent=0 // loop_header_branch
    %16 = sbr.rel (%p14) target = $region8
  $region5: #{feature_extractor_forward.1} parent=0 // loop_body
    %s18 = ssub.s32 %s13, 1
    %s19 = ssub.s32 %s13, 2
    %s26 = sadd.s32 1, %s21
    %p27 = scmp.ge.s32.totalorder %s26, 1
    %s28 = scalar_select %p27, 0, %s26
    %s29 = sadd.s32 1, %s20
    %s30 = scalar_select %p27, %s29, %s20
    %p31 = scmp.ge.s32.totalorder %s30, 2
    %s32 = scalar_select %p31, 0, %s30
    %s33 = ssub.s32 %s20, %s32
    %s34 = ssub.s32 %s21, %s28
    %s35 = sor.u32 %s33, %s34
    %p36 = scmp.eq.s32.totalorder %s35, 0
    %s38 = sadd.s32 %s37, 1
    %s39 = scalar_select %p36, %s37, %s38
    %p42 = pneg %p36
    %p43 = scmp.eq.s32.totalorder %s13, 1
    %p44 = por %p42, %p43
    %p45 = scmp.ne.s32.totalorder %s37, %s40
    %p46 = scmp.eq.s32.totalorder %s13, 0
    %p47 = por %p45, %p46
    %p48 = scmp.ne.s32.totalorder %s37, %s40
    %p49 = scmp.eq.s32.totalorder %s18, 1
    %p50 = por %p48, %p49
    %p51 = scmp.ne.s32.totalorder %s40, %s41
    %p52 = scmp.eq.s32.totalorder %s18, 0
    %p53 = por %p51, %p52
    %p54 = scmp.ne.s32.totalorder %s40, %s41
    %p55 = scmp.eq.s32.totalorder %s19, 1
    %p56 = por %p54, %p55
    %p58 = scmp.ne.s32.totalorder %s41, %s57
    %p59 = scmp.eq.s32.totalorder %s19, 0
    %p60 = por %p58, %p59
    %s62 = sadd.s32 %s61, 1
    %p65 = scmp.eq.s32.totalorder %s13, 1
    %p66 = scmp.ne.s32.totalorder %s61, %s63
    %p67 = scmp.eq.s32.totalorder %s13, 0
    %p68 = por %p66, %p67
    %p69 = scmp.ne.s32.totalorder %s61, %s63
    %p70 = scmp.eq.s32.totalorder %s18, 1
    %p71 = por %p69, %p70
    %p72 = scmp.ne.s32.totalorder %s63, %s64
    %p73 = scmp.eq.s32.totalorder %s18, 0
    %p74 = por %p72, %p73
    %p75 = scmp.ne.s32.totalorder %s63, %s64
    %p76 = scmp.eq.s32.totalorder %s19, 1
    %p77 = por %p75, %p76
    %p79 = scmp.ne.s32.totalorder %s64, %s78
    %p80 = scmp.eq.s32.totalorder %s19, 0
    %p81 = por %p79, %p80
    %s83 = sadd.s32 %s82, 1
    %p86 = scmp.eq.s32.totalorder %s13, 1
    %p87 = scmp.ne.s32.totalorder %s82, %s84
    %p88 = scmp.eq.s32.totalorder %s13, 0
    %p89 = por %p87, %p88
    %p90 = scmp.ne.s32.totalorder %s82, %s84
    %p91 = scmp.eq.s32.totalorder %s18, 1
    %p92 = por %p90, %p91
    %p93 = scmp.ne.s32.totalorder %s84, %s85
    %p94 = scmp.eq.s32.totalorder %s18, 0
    %p95 = por %p93, %p94
    %p96 = scmp.ne.s32.totalorder %s84, %s85
    %p97 = scmp.eq.s32.totalorder %s19, 1
    %p98 = por %p96, %p97
    %p100 = scmp.ne.s32.totalorder %s85, %s99
    %p101 = scmp.eq.s32.totalorder %s19, 0
    %p102 = por %p100, %p101
    %s104 = sadd.s32 %s103, 1
    %p107 = scmp.eq.s32.totalorder %s13, 1
    %p108 = scmp.ne.s32.totalorder %s103, %s105
    %p109 = scmp.eq.s32.totalorder %s13, 0
    %p110 = por %p108, %p109
    %p111 = scmp.ne.s32.totalorder %s103, %s105
    %p112 = scmp.eq.s32.totalorder %s18, 1
    %p113 = por %p111, %p112
    %p114 = scmp.ne.s32.totalorder %s105, %s106
    %p115 = scmp.eq.s32.totalorder %s18, 0
    %p116 = por %p114, %p115
    %p117 = scmp.ne.s32.totalorder %s105, %s106
    %p118 = scmp.eq.s32.totalorder %s19, 1
    %p119 = por %p117, %p118
    %p121 = scmp.ne.s32.totalorder %s106, %s120
    %p122 = scmp.eq.s32.totalorder %s19, 0
    %p123 = por %p121, %p122
    %s125 = sadd.s32 %s124, 1
    %p128 = scmp.eq.s32.totalorder %s13, 1
    %p129 = scmp.ne.s32.totalorder %s124, %s126
    %p130 = scmp.eq.s32.totalorder %s13, 0
    %p131 = por %p129, %p130
    %p132 = scmp.ne.s32.totalorder %s124, %s126
    %p133 = scmp.eq.s32.totalorder %s18, 1
    %p134 = por %p132, %p133
    %p135 = scmp.ne.s32.totalorder %s126, %s127
    %p136 = scmp.eq.s32.totalorder %s18, 0
    %p137 = por %p135, %p136
    %p138 = scmp.ne.s32.totalorder %s126, %s127
    %p139 = scmp.eq.s32.totalorder %s19, 1
    %p140 = por %p138, %p139
    %p142 = scmp.ne.s32.totalorder %s127, %s141
    %p143 = scmp.eq.s32.totalorder %s19, 0
    %p144 = por %p142, %p143
    %s146 = sadd.s32 %s145, 1
    %p149 = scmp.eq.s32.totalorder %s13, 1
    %p150 = scmp.ne.s32.totalorder %s145, %s147
    %p151 = scmp.eq.s32.totalorder %s13, 0
    %p152 = por %p150, %p151
    %p153 = scmp.ne.s32.totalorder %s145, %s147
    %p154 = scmp.eq.s32.totalorder %s18, 1
    %p155 = por %p153, %p154
    %p156 = scmp.ne.s32.totalorder %s147, %s148
    %p157 = scmp.eq.s32.totalorder %s18, 0
    %p158 = por %p156, %p157
    %p159 = scmp.ne.s32.totalorder %s147, %s148
    %p160 = scmp.eq.s32.totalorder %s19, 1
    %p161 = por %p159, %p160
    %p163 = scmp.ne.s32.totalorder %s148, %s162
    %p164 = scmp.eq.s32.totalorder %s19, 0
    %p165 = por %p163, %p164
    %s167 = sadd.s32 %s166, 1
    %p170 = scmp.eq.s32.totalorder %s13, 1
    %p171 = scmp.ne.s32.totalorder %s166, %s168
    %p172 = scmp.eq.s32.totalorder %s13, 0
    %p173 = por %p171, %p172
    %p174 = scmp.ne.s32.totalorder %s166, %s168
    %p175 = scmp.eq.s32.totalorder %s18, 1
    %p176 = por %p174, %p175
    %p177 = scmp.ne.s32.totalorder %s168, %s169
    %p178 = scmp.eq.s32.totalorder %s18, 0
    %p179 = por %p177, %p178
    %p180 = scmp.ne.s32.totalorder %s168, %s169
    %p181 = scmp.eq.s32.totalorder %s19, 1
    %p182 = por %p180, %p181
    %p184 = scmp.ne.s32.totalorder %s169, %s183
    %p185 = scmp.eq.s32.totalorder %s19, 0
    %p186 = por %p184, %p185
    %s187 = ssub.s32 %s20, %s32
    %s188 = ssub.s32 %s21, %s28
    %s189 = sor.u32 %s187, %s188
    %p190 = scmp.eq.s32.totalorder %s189, 0
    %s192 = sadd.s32 %s191, 1
    %s193 = scalar_select %p190, %s191, %s192
    %p196 = pneg %p190
    %p197 = scmp.eq.s32.totalorder %s13, 1
    %p198 = por %p196, %p197
    %p199 = scmp.ne.s32.totalorder %s191, %s194
    %p200 = scmp.eq.s32.totalorder %s13, 0
    %p201 = por %p199, %p200
    %p202 = scmp.ne.s32.totalorder %s191, %s194
    %p203 = scmp.eq.s32.totalorder %s18, 1
    %p204 = por %p202, %p203
    %p205 = scmp.ne.s32.totalorder %s194, %s195
    %p206 = scmp.eq.s32.totalorder %s18, 0
    %p207 = por %p205, %p206
    %p208 = scmp.ne.s32.totalorder %s194, %s195
    %p209 = scmp.eq.s32.totalorder %s19, 1
    %p210 = por %p208, %p209
    %p212 = scmp.ne.s32.totalorder %s195, %s211
    %p213 = scmp.eq.s32.totalorder %s19, 0
    %p214 = por %p212, %p213
    %p215 = scmp.le.s32.totalorder 1, %s13
    %p216 = scmp.lt.s32.totalorder %s13, 3
    %p217 = pnand %p215, %p216
    %p218 = pneg %p217
    // Predicated region
    $region9: #{feature_extractor_forward.1} parent=5 // pred_check
      _
    $region10: #{feature_extractor_forward.1} parent=5 // pred_check_branch
      %220 = sbr.rel (%p217) target = $region12
    $region11: #{feature_extractor_forward.1} parent=5 // pred_region
      %s221 = ssub.s32 %s13, 1
      // Predicated region
      $region13: #{feature_extractor_forward.1} parent=11 // pred_check
        %p222 = pneg %p74
      $region14: #{feature_extractor_forward.1} parent=11 // pred_check_branch
        %224 = sbr.rel (%p222) target = $region16
      $region15: #{feature_extractor_forward.1} parent=11 // pred_region
        _
      $region16: #{feature_extractor_forward.1} parent=11 // pred_fallthru
        _
      // Predicated region
      $region17: #{feature_extractor_forward.1} parent=11 // pred_check
        %p225 = pneg %p95
      $region18: #{feature_extractor_forward.1} parent=11 // pred_check_branch
        %227 = sbr.rel (%p225) target = $region20
      $region19: #{feature_extractor_forward.1} parent=11 // pred_region
        _
      $region20: #{feature_extractor_forward.1} parent=11 // pred_fallthru
        _
      // Predicated region
      $region21: #{feature_extractor_forward.1} parent=11 // pred_check
        %p228 = pneg %p116
      $region22: #{feature_extractor_forward.1} parent=11 // pred_check_branch
        %230 = sbr.rel (%p228) target = $region24
      $region23: #{feature_extractor_forward.1} parent=11 // pred_region
        _
      $region24: #{feature_extractor_forward.1} parent=11 // pred_fallthru
        _
      // Predicated region
      $region25: #{feature_extractor_forward.1} parent=11 // pred_check
        %p231 = pneg %p137
      $region26: #{feature_extractor_forward.1} parent=11 // pred_check_branch
        %233 = sbr.rel (%p231) target = $region28
      $region27: #{feature_extractor_forward.1} parent=11 // pred_region
        _
      $region28: #{feature_extractor_forward.1} parent=11 // pred_fallthru
        _
      // Predicated region
      $region29: #{feature_extractor_forward.1} parent=11 // pred_check
        %p234 = pneg %p158
      $region30: #{feature_extractor_forward.1} parent=11 // pred_check_branch
        %236 = sbr.rel (%p234) target = $region32
      $region31: #{feature_extractor_forward.1} parent=11 // pred_region
        _
      $region32: #{feature_extractor_forward.1} parent=11 // pred_fallthru
        _
      // Predicated region
      $region33: #{feature_extractor_forward.1} parent=11 // pred_check
        %p237 = pneg %p179
      $region34: #{feature_extractor_forward.1} parent=11 // pred_check_branch
        %239 = sbr.rel (%p237) target = $region36
      $region35: #{feature_extractor_forward.1} parent=11 // pred_region
        _
      $region36: #{feature_extractor_forward.1} parent=11 // pred_fallthru
        _
    $region12: #{feature_extractor_forward.1} parent=5 // pred_fallthru
      _
    %p240 = scmp.lt.s32.totalorder %s13, 2
    // Predicated region
    $region37: #{feature_extractor_forward.1} parent=5 // pred_check
      %p241 = pneg %p240
    $region38: #{feature_extractor_forward.1} parent=5 // pred_check_branch
      %243 = sbr.rel (%p241) target = $region40
    $region39: #{feature_extractor_forward.1} parent=5 // pred_region
      // Predicated region
      $region41: #{feature_extractor_forward.1} parent=39 // pred_check
        %p244 = pneg %p47
      $region42: #{feature_extractor_forward.1} parent=39 // pred_check_branch
        %246 = sbr.rel (%p244) target = $region44
      $region43: #{feature_extractor_forward.1} parent=39 // pred_region
        %s247 = smul.u32 2, %s21
        %p248 = scmp.lt.s32.totalorder %s20, 1
        %s249 = scalar_select %p248, %s20, 1
        %p250 = scmp.lt.s32.totalorder %s247, 1
        %s251 = scalar_select %p250, %s247, 1
        %s252 = smul.addr %s249, 2
        %s253 = sadd.s32 %s251, %s252
        %s254 = smul.addr %s253, 4
        %s255 = scalar_lea.vmem %s0, %s254
        %s256 = smul.u32 2, %s21
      $region44: #{feature_extractor_forward.1} parent=39 // pred_fallthru
        _
    $region40: #{feature_extractor_forward.1} parent=5 // pred_fallthru
      _
    %p257 = scmp.le.s32.totalorder 1, %s13
    %p258 = scmp.lt.s32.totalorder %s13, 3
    %p259 = pnand %p257, %p258
    %p260 = pneg %p259
    // Predicated region
    $region45: #{feature_extractor_forward.1} parent=5 // pred_check
      _
    $region46: #{feature_extractor_forward.1} parent=5 // pred_check_branch
      %262 = sbr.rel (%p259) target = $region48
    $region47: #{feature_extractor_forward.1} parent=5 // pred_region
      %s263 = ssub.s32 %s13, 1
      %s264 = smul.u32 2, %s23
      %p265 = scmp.lt.s32.totalorder %s22, 1
      %s266 = scalar_select %p265, %s22, 1
      %p267 = scmp.lt.s32.totalorder %s264, 1
      %s268 = scalar_select %p267, %s264, 1
      %s269 = smul.addr %s266, 2
      %s270 = sadd.s32 %s268, %s269
      %s271 = smul.addr %s270, 4
      %s272 = scalar_lea.vmem %s0, %s271
      %p273 = pneg %p53
      %p274 = pneg %p50
      %p275 = pneg %p74
      %p276 = pneg %p71
      %p277 = pneg %p95
      %p278 = pneg %p92
      %p279 = pneg %p116
      %p280 = pneg %p113
      %p281 = pneg %p137
      %p282 = pneg %p134
      %p283 = pneg %p158
      %p284 = pneg %p155
      %p285 = pneg %p179
      %p286 = pneg %p176
      %p287 = pneg %p207
      %p288 = pneg %p204
      %s289 = smul.u32 2, %s23
      %p290 = scmp.lt.s32.totalorder %s22, 1
      %s291 = scalar_select %p290, %s22, 1
      %p292 = scmp.lt.s32.totalorder %s289, 1
      %s293 = scalar_select %p292, %s289, 1
      %s294 = smul.addr %s291, 2
      %s295 = sadd.s32 %s293, %s294
      %s296 = smul.addr %s295, 8
      %s297 = scalar_lea.vmem %s7, %s296
      %s298 = smul.u32 2, %s23
      %p299 = scmp.lt.s32.totalorder %s22, 1
      %s300 = scalar_select %p299, %s22, 1
      %p301 = scmp.lt.s32.totalorder %s298, 1
      %s302 = scalar_select %p301, %s298, 1
      %s303 = smul.addr %s300, 2
      %s304 = sadd.s32 %s302, %s303
      %s305 = smul.addr %s304, 4
      %s306 = scalar_lea.vmem %s0, %s305
      %s307 = smul.u32 2, %s23
      %s308 = smul.u32 2, %s23
      %p309 = scmp.lt.s32.totalorder %s22, 1
      %s310 = scalar_select %p309, %s22, 1
      %p311 = scmp.lt.s32.totalorder %s308, 1
      %s312 = scalar_select %p311, %s308, 1
      %s313 = smul.addr %s310, 2
      %s314 = sadd.s32 %s312, %s313
      %s315 = smul.addr %s314, 8
      %s316 = scalar_lea.vmem %s7, %s315
      %s317 = smul.u32 2, %s23
      %v319 = vld [vmem:[%s306] sm:$0xff]
      %v321 = vcombine.high %v319, %v319
      %v323 = vpack.c.bf16 %v319, %v319
      %v324 = vpack.c.bf16 %v321, %v321
      %v325 = vld [vmem:[%s1] sm:$0xf]
      %v326 = vld [vmem:[%s1 + $0x4] sm:$0xf]
      %v327 = vld [vmem:[%s1 + $0x8] sm:$0xf]
      %v328 = vld [vmem:[%s1 + $0xc] sm:$0xf]
      %v329 = vld [vmem:[%s2] sm:$0xff]
      %v330 = vld [vmem:[%s2 + $0x8] sm:$0xff]
      %v331 = vld [vmem:[%s2 + $0x10] sm:$0xff]
      %v332 = vld [vmem:[%s2 + $0x18] sm:$0xff]
      %334 = vset.pattern.permute.xlu0 0
      %335 = vperm.xlu0 %334, %v329
      %v336 = vpop.permute.xlu0 %335
      %339 = vset.pattern.permute.xlu0 0
      %340 = vperm.xlu0 %339, %v330
      %v341 = vpop.permute.xlu0 %340
      %344 = vset.pattern.permute.xlu0 0
      %345 = vperm.xlu0 %344, %v331
      %v346 = vpop.permute.xlu0 %345
      %349 = vset.pattern.permute.xlu0 0
      %350 = vperm.xlu0 %349, %v332
      %v351 = vpop.permute.xlu0 %350
      %v357 = vunpack.c.l.b16 %v325
      %v358 = vunpack.c.l.b16 %v326
      %v359 = vunpack.c.l.b16 %v327
      %v360 = vunpack.c.l.b16 %v328
      %v361 = vpack.c.b16 %v358, %v357
      %v362 = vpack.c.b16 %v360, %v359
      %vm363 = vcmask 31744
      %v365 = vsel %vm363, %v361, 0
      %v368 = vsel %vm363, %v362, 0
      %vm370 = vcmask 1041408
      %v372 = vsel %vm370, %v323, 0
      %v375 = vsel %vm370, %v324, 0
      %377 = vmatprep.subr.bf16.mxu0 %v375
      %378 = vmatpush1.bf16.msra.mxu0 %v372
      %379 = vmatprep.subr.bf16.mxu0 0
      %380 = vmatpush1.bf16.msra.mxu0 0
      %381 = vmatprep.subr.bf16.mxu0 0
      %382 = vmatpush1.bf16.msra.mxu0 0
      %383 = vmatprep.subr.bf16.mxu0 0
      %384 = vmatpush1.bf16.msra.mxu0 0
      %385 = vmatprep.subr.bf16.mxu0 0
      %386 = vmatpush1.bf16.msra.mxu0 0
      %387 = vmatprep.subr.bf16.mxu0 0
      %388 = vmatpush1.bf16.msra.mxu0 0
      %389 = vmatprep.subr.bf16.mxu0 0
      %390 = vmatpush1.bf16.msra.mxu0 0
      %391 = vmatprep.subr.bf16.mxu0 0
      %392 = vmatpush1.bf16.msra.mxu0 0
      %393 = vmatprep.subr.bf16.mxu0 0
      %394 = vmatpush1.bf16.msra.mxu0 0
      %395 = vmatprep.subr.bf16.mxu0 0
      %396 = vmatpush1.bf16.msra.mxu0 0
      %397 = vmatprep.subr.bf16.mxu0 0
      %398 = vmatpush1.bf16.msra.mxu0 0
      %399 = vmatprep.subr.bf16.mxu0 0
      %400 = vmatpush1.bf16.msra.mxu0 0
      %401 = vmatprep.subr.bf16.mxu0 0
      %402 = vmatpush1.bf16.msra.mxu0 0
      %403 = vmatprep.subr.bf16.mxu0 0
      %404 = vmatpush1.bf16.msra.mxu0 0
      %405 = vmatprep.subr.bf16.mxu0 0
      %406 = vmatpush1.bf16.msra.mxu0 0
      %407 = vmatprep.subr.bf16.mxu0 0
      %408 = vmatpush1.bf16.msra.mxu0 0
      %409 = vmatprep.mubr.bf16.mxu0 0
      %410 = vmatmul.mubr.bf16.gmra.mrb[0].mxu0 %v365
      %v411 = vpop.f32.mrb[0].mxu0
      %v412 = vadd.f32 %v336, %v411
      %v413 = vpop.f32.mrb[0].mxu0
      %v414 = vadd.f32 %v336, %v413
      %v415 = vpop.f32.mrb[0].mxu0
      %v416 = vadd.f32 %v341, %v415
      %v417 = vpop.f32.mrb[0].mxu0
      %v418 = vadd.f32 %v341, %v417
      %419 = vmatprep.mubr.bf16.mxu0 0
      %420 = vmatmul.mubr.bf16.gmra.mrb[0].mxu0 %v368
      %v421 = vpop.f32.mrb[0].mxu0
      %v422 = vadd.f32 %v346, %v421
      %v423 = vpop.f32.mrb[0].mxu0
      %v424 = vadd.f32 %v346, %v423
      %v425 = vpop.f32.mrb[0].mxu0
      %v426 = vadd.f32 %v351, %v425
      %v427 = vpop.f32.mrb[0].mxu0
      %v428 = vadd.f32 %v351, %v427
      %429 = vdwg.mxu0
      %v430 = vmax.f32 %v412, 0.0
      %v431 = vmax.f32 %v414, 0.0
      %v432 = vmax.f32 %v416, 0.0
      %v433 = vmax.f32 %v418, 0.0
      %v434 = vmax.f32 %v422, 0.0
      %v435 = vmax.f32 %v424, 0.0
      %v436 = vmax.f32 %v426, 0.0
      %v437 = vmax.f32 %v428, 0.0
      %v438 = vpack.c.bf16 %v432, %v430
      %v439 = vpack.c.bf16 %v433, %v431
      %v440 = vpack.c.bf16 %v436, %v434
      %v441 = vpack.c.bf16 %v437, %v435
      %v442 = vld [vmem:[%s3] sm:$0xf]
      %v443 = vld [vmem:[%s3 + $0x4] sm:$0xf]
      %v444 = vld [vmem:[%s3 + $0x8] sm:$0xf]
      %v445 = vld [vmem:[%s3 + $0xc] sm:$0xf]
      %v446 = vld [vmem:[%s4] sm:$0xff]
      %v447 = vld [vmem:[%s4 + $0x8] sm:$0xff]
      %v448 = vld [vmem:[%s4 + $0x10] sm:$0xff]
      %v449 = vld [vmem:[%s4 + $0x18] sm:$0xff]
      %451 = vset.pattern.permute.xlu0 0
      %452 = vperm.xlu0 %451, %v446
      %v453 = vpop.permute.xlu0 %452
      %456 = vset.pattern.permute.xlu0 0
      %457 = vperm.xlu0 %456, %v447
      %v458 = vpop.permute.xlu0 %457
      %461 = vset.pattern.permute.xlu0 0
      %462 = vperm.xlu0 %461, %v448
      %v463 = vpop.permute.xlu0 %462
      %466 = vset.pattern.permute.xlu0 0
      %467 = vperm.xlu0 %466, %v449
      %v468 = vpop.permute.xlu0 %467
      %v474 = vunpack.c.l.b16 %v442
      %v475 = vunpack.c.l.b16 %v443
      %v476 = vunpack.c.l.b16 %v444
      %v477 = vunpack.c.l.b16 %v445
      %v478 = vpack.c.b16 %v475, %v474
      %v479 = vpack.c.b16 %v477, %v476
      %vm480 = vcmask 261120
      %v482 = vsel %vm480, %v478, 0
      %v485 = vsel %vm480, %v479, 0
      %487 = vmatprep.subr.bf16.mxu0 %v439
      %488 = vmatpush1.bf16.msra.mxu0 %v438
      %489 = vmatprep.subr.bf16.mxu0 %v441
      %490 = vmatpush1.bf16.msra.mxu0 %v440
      %491 = vmatprep.subr.bf16.mxu0 0
      %492 = vmatpush1.bf16.msra.mxu0 0
      %493 = vmatprep.subr.bf16.mxu0 0
      %494 = vmatpush1.bf16.msra.mxu0 0
      %495 = vmatprep.subr.bf16.mxu0 0
      %496 = vmatpush1.bf16.msra.mxu0 0
      %497 = vmatprep.subr.bf16.mxu0 0
      %498 = vmatpush1.bf16.msra.mxu0 0
      %499 = vmatprep.subr.bf16.mxu0 0
      %500 = vmatpush1.bf16.msra.mxu0 0
      %501 = vmatprep.subr.bf16.mxu0 0
      %502 = vmatpush1.bf16.msra.mxu0 0
      %503 = vmatprep.subr.bf16.mxu0 0
      %504 = vmatpush1.bf16.msra.mxu0 0
      %505 = vmatprep.subr.bf16.mxu0 0
      %506 = vmatpush1.bf16.msra.mxu0 0
      %507 = vmatprep.subr.bf16.mxu0 0
      %508 = vmatpush1.bf16.msra.mxu0 0
      %509 = vmatprep.subr.bf16.mxu0 0
      %510 = vmatpush1.bf16.msra.mxu0 0
      %511 = vmatprep.subr.bf16.mxu0 0
      %512 = vmatpush1.bf16.msra.mxu0 0
      %513 = vmatprep.subr.bf16.mxu0 0
      %514 = vmatpush1.bf16.msra.mxu0 0
      %515 = vmatprep.subr.bf16.mxu0 0
      %516 = vmatpush1.bf16.msra.mxu0 0
      %517 = vmatprep.subr.bf16.mxu0 0
      %518 = vmatpush1.bf16.msra.mxu0 0
      %519 = vmatprep.mubr.bf16.mxu0 0
      %520 = vmatmul.mubr.bf16.gmra.mrb[0].mxu0 %v482
      %v521 = vpop.f32.mrb[0].mxu0
      %v522 = vadd.f32 %v453, %v521
      %v523 = vpop.f32.mrb[0].mxu0
      %v524 = vadd.f32 %v453, %v523
      %v525 = vpop.f32.mrb[0].mxu0
      %v526 = vadd.f32 %v458, %v525
      %v527 = vpop.f32.mrb[0].mxu0
      %v528 = vadd.f32 %v458, %v527
      %529 = vmatprep.mubr.bf16.mxu0 0
      %530 = vmatmul.mubr.bf16.gmra.mrb[0].mxu0 %v485
      %v531 = vpop.f32.mrb[0].mxu0
      %v532 = vadd.f32 %v463, %v531
      %v533 = vpop.f32.mrb[0].mxu0
      %v534 = vadd.f32 %v463, %v533
      %v535 = vpop.f32.mrb[0].mxu0
      %v536 = vadd.f32 %v468, %v535
      %v537 = vpop.f32.mrb[0].mxu0
      %v538 = vadd.f32 %v468, %v537
      %539 = vdwg.mxu0
      %v540 = vmax.f32 %v522, 0.0
      %v541 = vmax.f32 %v524, 0.0
      %v542 = vmax.f32 %v526, 0.0
      %v543 = vmax.f32 %v528, 0.0
      %v544 = vmax.f32 %v532, 0.0
      %v545 = vmax.f32 %v534, 0.0
      %v546 = vmax.f32 %v536, 0.0
      %v547 = vmax.f32 %v538, 0.0
      %v548 = vpack.c.bf16 %v542, %v540
      %v549 = vpack.c.bf16 %v543, %v541
      %v550 = vpack.c.bf16 %v546, %v544
      %v551 = vpack.c.bf16 %v547, %v545
      %v552 = vld [vmem:[%s5] sm:$0xf]
      %v553 = vld [vmem:[%s6] sm:$0xff]
      %555 = vset.pattern.permute.xlu0 0
      %556 = vperm.xlu0 %555, %v553
      %v557 = vpop.permute.xlu0 %556
      %v560 = vsel %vm480, %v552, 0
      %562 = vmatprep.subr.bf16.mxu0 %v549
      %563 = vmatpush1.bf16.msra.mxu0 %v548
      %564 = vmatprep.subr.bf16.mxu0 %v551
      %565 = vmatpush1.bf16.msra.mxu0 %v550
      %566 = vmatprep.subr.bf16.mxu0 0
      %567 = vmatpush1.bf16.msra.mxu0 0
      %568 = vmatprep.subr.bf16.mxu0 0
      %569 = vmatpush1.bf16.msra.mxu0 0
      %570 = vmatprep.subr.bf16.mxu0 0
      %571 = vmatpush1.bf16.msra.mxu0 0
      %572 = vmatprep.subr.bf16.mxu0 0
      %573 = vmatpush1.bf16.msra.mxu0 0
      %574 = vmatprep.subr.bf16.mxu0 0
      %575 = vmatpush1.bf16.msra.mxu0 0
      %576 = vmatprep.subr.bf16.mxu0 0
      %577 = vmatpush1.bf16.msra.mxu0 0
      %578 = vmatprep.subr.bf16.mxu0 0
      %579 = vmatpush1.bf16.msra.mxu0 0
      %580 = vmatprep.subr.bf16.mxu0 0
      %581 = vmatpush1.bf16.msra.mxu0 0
      %582 = vmatprep.subr.bf16.mxu0 0
      %583 = vmatpush1.bf16.msra.mxu0 0
      %584 = vmatprep.subr.bf16.mxu0 0
      %585 = vmatpush1.bf16.msra.mxu0 0
      %586 = vmatprep.subr.bf16.mxu0 0
      %587 = vmatpush1.bf16.msra.mxu0 0
      %588 = vmatprep.subr.bf16.mxu0 0
      %589 = vmatpush1.bf16.msra.mxu0 0
      %590 = vmatprep.subr.bf16.mxu0 0
      %591 = vmatpush1.bf16.msra.mxu0 0
      %592 = vmatprep.subr.bf16.mxu0 0
      %593 = vmatpush1.bf16.msra.mxu0 0
      %594 = vmatprep.mubr.bf16.mxu0 0
      %595 = vmatmul.mubr.bf16.gmra.mrb[0].mxu0 %v560
      %v596 = vpop.f32.mrb[0].mxu0
      %v597 = vadd.f32 %v557, %v596
      %v598 = vpop.f32.mrb[0].mxu0
      %v599 = vadd.f32 %v557, %v598
      %v600 = vpop.f32.mrb[0].mxu0
      %v601 = vpop.f32.mrb[0].mxu0
      %602 = vdwg.mxu0
      %v603 = vxor.u32 %v597, 2147483648
      %v604 = vxor.u32 %v599, 2147483648
      %v605 = vmul.f32 %v603, 1.442695
      %v606 = vpow.pop %v605
      %v607 = vmul.f32 %v604, 1.442695
      %v608 = vpow.pop %v607
      %v609 = vadd.f32 %v606, 1.0
      %v610 = vadd.f32 %v608, 1.0
      %v611 = vrcp.pop %v609
      %v612 = vmul.f32 1.0, %v611
      %v613 = vrcp.pop %v610
      %v614 = vmul.f32 1.0, %v613
      %615 = vst [vmem:[%s316] sm:$0xff] %v612
      %616 = vst [vmem:[%s316 + $0x8] sm:$0xff] %v614
      %s617 = smul.u32 2, %s23
      %p618 = scmp.lt.s32.totalorder %s22, 1
      %s619 = scalar_select %p618, %s22, 1
      %p620 = scmp.lt.s32.totalorder %s617, 1
      %s621 = scalar_select %p620, %s617, 1
      %s622 = smul.addr %s619, 2
      %s623 = sadd.s32 %s621, %s622
      %s624 = smul.addr %s623, 8
      %s625 = scalar_lea.vmem %s7, %s624
      // Predicated region
      $region49: #{feature_extractor_forward.1} parent=47 // pred_check
        %p626 = pneg %p204
      $region50: #{feature_extractor_forward.1} parent=47 // pred_check_branch
        %628 = sbr.rel (%p626) target = $region52
      $region51: #{feature_extractor_forward.1} parent=47 // pred_region
        %s629 = smul.u32 2, %s23
      $region52: #{feature_extractor_forward.1} parent=47 // pred_fallthru
        _
    $region48: #{feature_extractor_forward.1} parent=5 // pred_fallthru
      _
    %p630 = scmp.le.s32.totalorder 2, %s13
    // Predicated region
    $region53: #{feature_extractor_forward.1} parent=5 // pred_check
      %p631 = pneg %p630
    $region54: #{feature_extractor_forward.1} parent=5 // pred_check_branch
      %633 = sbr.rel (%p631) target = $region56
    $region55: #{feature_extractor_forward.1} parent=5 // pred_region
      %s634 = ssub.s32 %s13, 2
      // Predicated region
      $region57: #{feature_extractor_forward.1} parent=55 // pred_check
        %p635 = pneg %p210
      $region58: #{feature_extractor_forward.1} parent=55 // pred_check_branch
        %637 = sbr.rel (%p635) target = $region60
      $region59: #{feature_extractor_forward.1} parent=55 // pred_region
        %s638 = smul.u32 2, %s25
        %p639 = scmp.lt.s32.totalorder %s24, 1
        %s640 = scalar_select %p639, %s24, 1
        %p641 = scmp.lt.s32.totalorder %s638, 1
        %s642 = scalar_select %p641, %s638, 1
        %s643 = smul.addr %s640, 2
        %s644 = sadd.s32 %s642, %s643
        %s645 = smul.addr %s644, 8
        %s646 = scalar_lea.vmem %s7, %s645
      $region60: #{feature_extractor_forward.1} parent=55 // pred_fallthru
        _
    $region56: #{feature_extractor_forward.1} parent=5 // pred_fallthru
      _
  $region6: #{feature_extractor_forward.1} parent=0 // loop_footer
    %s17 = sadd.s32 1, %s13
  $region7: #{feature_extractor_forward.1} parent=0 // loop_footer_branch
    %12 = sbr.rel target = $region3
  $region8: #{feature_extractor_forward.1} parent=0 // loop_exit
    _

</llo_original>
